<compile_context>
chip_gen: v7x
topology: tpu7x:2x2x1
jax: 0.10.0
libtpu: 0.0.40
codegen_flags: <defaults>
</compile_context>

<pallas_src>
import functools

import jax
import jax.numpy as jnp
from jax.experimental import pallas as pl
from jax.experimental.pallas import tpu as pltpu


_LANE = 128
_BLOCK_BYTES = 8 * 1024 * 1024      # per-block byte budget (dtype invariant)
_MIN_GRID_STEPS = 4                 # keep >= 4 steps so both v7x TCs double-buffer
_VMEM_LIMIT_BYTES = 48 * 1024 * 1024
_SMALL_INPUT_ELEMS = 16 * 1024      # below this, plain jnp beats pallas_call overhead
_SUBLANE = {4: 8, 2: 16, 1: 32}     # second-minor tile requirement per itemsize


def _dorefa_fm_kernel(x_ref, o_ref, *, clip, scale, inv_scale):
    """Elementwise DoReFa fm quantization on one (blk_m, width) block.

    Loads the native input dtype, computes in f32, stores the output dtype
    (casts folded into the kernel: HBM traffic stays at 1 read + 1 write).
    """
    x = x_ref[...].astype(jnp.float32)
    y = jnp.clip(x, 0.0, clip)
    q = jnp.round(y * scale)
    if inv_scale is None:
        q = q / scale          # bit-exact match with the torch reference
    else:
        q = q * inv_scale      # divide-free variant (<= 1 ulp difference)
    o_ref[...] = q.astype(o_ref.dtype)


def _dorefa_fm_reference(x, clip, num_levels):
    """Plain-JAX reference. Also the fast path for tiny / 128-unaligned tensors
    (a fused elementwise pass is exactly 1 HBM read + 1 write: optimal)."""
    scale = (num_levels - 1) / clip
    y = jnp.clip(x.astype(jnp.float32), 0.0, clip)
    return (jnp.round(y * scale) / scale).astype(x.dtype)


def _pick_width(total):
    """Widest lane-dense last dim that divides the element count."""
    for w in (1024, 512, 256, 128):
        if total % w == 0:
            return w
    return None


def _pick_block_rows(rows, width, itemsize):
    """Block rows from the byte budget, multiple of the dtype sublane tile,
    capped so large tensors keep >= _MIN_GRID_STEPS grid steps."""
    sub = _SUBLANE.get(itemsize, 8)
    budget = max(sub, _BLOCK_BYTES // (width * itemsize))
    cap = -(-rows // _MIN_GRID_STEPS)          # ceil(rows / 4)
    blk = min(budget, cap)
    blk = (blk // sub) * sub                   # sublane-tile multiple
    if blk < sub or blk >= rows:
        return rows                            # full-extent block (always legal)
    return blk


def dorefa_fm_quantize(x, clip_val, num_levels=256, *, bit_exact=True,
                       donate_input=False):
    """DoReFa feature-map quantization of an arbitrary-shape tensor."""
    clip = float(clip_val)
    scale = (num_levels - 1) / clip

    total = x.size
    width = _pick_width(total)
    if total < _SMALL_INPUT_ELEMS or width is None:
        # Tiny tensors: pallas_call launch overhead dominates.
        # Unaligned tensors (total % 128 != 0): any pad/slice + kernel combo is
        # ~3x the HBM traffic of this single fused jnp pass, so just fuse.
        return _dorefa_fm_reference(x, clip, num_levels)

    orig_shape = x.shape
    rows = total // width
    x2 = x.reshape(rows, width)                # lane-dense slab, no padding/copy

    blk_m = _pick_block_rows(rows, width, x.dtype.itemsize)
    grid = (pl.cdiv(rows, blk_m),)             # masked tail block handles remainders

    kernel = functools.partial(
        _dorefa_fm_kernel, clip=clip, scale=scale,
        inv_scale=None if bit_exact else clip / (num_levels - 1))

    cost = pl.CostEstimate(
        flops=6 * total,
        transcendentals=0,
        bytes_accessed=2 * total * x.dtype.itemsize)

    out = pl.pallas_call(
        kernel,
        out_shape=jax.ShapeDtypeStruct((rows, width), x.dtype),
        grid=grid,
        in_specs=[pl.BlockSpec((blk_m, width), lambda i: (i, 0))],
        out_specs=pl.BlockSpec((blk_m, width), lambda i: (i, 0)),
        # Only alias when the caller can give up x (e.g. inference feature maps);
        # XLA copies if the buffer is still live, so it is never unsafe.
        input_output_aliases={0: 0} if donate_input else {},
        cost_estimate=cost,
        compiler_params=pltpu.CompilerParams(
            dimension_semantics=("parallel",),   # shards the 1-D grid across v7x's 2 TCs
            vmem_limit_bytes=_VMEM_LIMIT_BYTES,  # headroom for 8 MiB double-buffered blocks
        ),
    )(x2)

    return out.reshape(orig_shape)


class QuantizationPallas:
    """Mirror of the PyTorch `quantization` module forward for the plain
    DoReFa feature-map path (tag='fm', 'dorefa' keyword, half_range=True)."""

    def __init__(self, bit=8, boundary=1.0, half_range=True, stable=0,
                 bit_exact=True):
        self.enable = True
        self.method = 'dorefa'
        self.tag = 'fm'
        self.bit = int(bit)
        self.num_levels = int(2 ** self.bit)
        self.half_range = bool(half_range)
        self.clip_val = float(boundary)   # plain float (non-trainable) in this branch
        self.stable = int(stable)
        self.bit_exact = bool(bit_exact)
        self.times = 0
        # TODO(synk): lqnet / xnor / pact / lsq / proxquant branches, the
        # trainable clip_val (STE backward) and the 'probe' torch.save side
        # effects have no Pallas equivalent here.

    def __call__(self, x):
        if not self.enable:
            return x
        # torch forward increments times, then quantization_value() checks
        # `times < stable` (warm-up -> return latent x).  Do the check BEFORE
        # running the kernel so warm-up steps skip the full HBM read+write pass.
        self.times += 1
        if self.times < self.stable:
            return x
        return dorefa_fm_quantize(x, self.clip_val, self.num_levels,
                                  bit_exact=self.bit_exact)


if __name__ == "__main__":
    key = jax.random.PRNGKey(0)
    k1, k2, k3, k4, k5, k6 = jax.random.split(key, 6)

    quant = QuantizationPallas(bit=8, boundary=1.0, half_range=True)
    n_levels = quant.num_levels

    # 1) module-sized demo input (tiny -> jnp fast path)
    x_small = jax.random.normal(k1, (2, 4, 16, 16), dtype=jnp.float32)
    y_small = jax.block_until_ready(quant(x_small))
    assert y_small.shape == x_small.shape and y_small.dtype == x_small.dtype
    assert jnp.allclose(y_small, _dorefa_fm_reference(x_small, 1.0, n_levels), atol=1e-6)

    # 2) feature map large enough for the Pallas path (width=1024 slab,
    #    multi-block grid with a masked partial tail block)
    x_f32 = jax.random.normal(k2, (2, 8, 56, 56), dtype=jnp.float32)
    y_f32 = jax.block_until_ready(quant(x_f32))
    assert y_f32.shape == x_f32.shape and y_f32.dtype == x_f32.dtype
    assert jnp.allclose(y_f32, _dorefa_fm_reference(x_f32, 1.0, n_levels), atol=1e-6)

    # 2b) donated-input variant (input_output_aliases={0: 0}); reference is
    #     computed first since the caller gives up x afterwards.
    x_don = jax.random.normal(k3, (2, 8, 56, 56), dtype=jnp.float32)
    ref_don = _dorefa_fm_reference(x_don, 1.0, n_levels)
    y_don = jax.block_until_ready(
        dorefa_fm_quantize(x_don, 1.0, n_levels, donate_input=True))
    assert jnp.allclose(y_don, ref_don, atol=1e-6)
    del x_don

    # 3) element count divisible by 256 but not 512 -> width=256 slab,
    #    byte-budget/grid-cap block selection, masked tail
    x_w256 = jax.random.normal(k4, (6, 128, 35), dtype=jnp.float32)
    y_w256 = jax.block_until_ready(quant(x_w256))
    assert y_w256.shape == x_w256.shape
    assert jnp.allclose(y_w256, _dorefa_fm_reference(x_w256, 1.0, n_levels), atol=1e-6)

    # 4) element count not a multiple of 128 -> fused jnp path (no pad/slice copies)
    x_odd = jax.random.normal(k5, (3, 7, 31, 37), dtype=jnp.float32)
    y_odd = jax.block_until_ready(quant(x_odd))
    assert y_odd.shape == x_odd.shape
    assert jnp.allclose(y_odd, _dorefa_fm_reference(x_odd, 1.0, n_levels), atol=1e-6)

    # 5) bf16 feature map: dtype conversion handled inside the kernel
    x_bf16 = jax.random.normal(k6, (2, 8, 56, 56), dtype=jnp.bfloat16)
    y_bf16 = jax.block_until_ready(quant(x_bf16))
    ref_bf16 = _dorefa_fm_reference(x_bf16, 1.0, n_levels)
    assert y_bf16.dtype == jnp.bfloat16
    assert jnp.allclose(y_bf16.astype(jnp.float32),
                        ref_bf16.astype(jnp.float32), atol=1e-2)

    print("KERNEL_OK")
</pallas_src>

<mosaic_0001>
module attributes {stable_mosaic.version = 11 : i64} {
  func.func @_dorefa_fm_kernel(%arg0: i32, %arg1: memref<8x1024xf32, #tpu.memory_space<vmem>>, %arg2: memref<8x1024xf32, #tpu.memory_space<vmem>>) attributes {dimension_semantics = [#tpu.dimension_semantics<parallel>], iteration_bounds = array<i64: 7>, scalar_prefetch = 0 : i64, scratch_operands = 0 : i64, tpu.core_type = #tpu.core_type<tc>, window_params = [{transform_indices = @transform_0, window_bounds = array<i64: 8, 1024>}, {transform_indices = @transform_1, window_bounds = array<i64: 8, 1024>}]} {
    %c0 = arith.constant 0 : index
    %c0_0 = arith.constant 0 : index
    %0 = vector.load %arg1[%c0, %c0_0] : memref<8x1024xf32, #tpu.memory_space<vmem>>, vector<8x1024xf32>
    %cst = arith.constant 0.000000e+00 : f32
    %cst_1 = arith.constant 1.000000e+00 : f32
    %1 = vector.broadcast %cst : f32 to vector<8x1024xf32>
    %2 = arith.maximumf %1, %0 : vector<8x1024xf32>
    %3 = vector.broadcast %cst_1 : f32 to vector<8x1024xf32>
    %4 = arith.minimumf %3, %2 : vector<8x1024xf32>
    %cst_2 = arith.constant 2.550000e+02 : f32
    %5 = vector.broadcast %cst_2 : f32 to vector<8x1024xf32>
    %6 = arith.mulf %4, %5 : vector<8x1024xf32>
    %7 = math.roundeven %6 : vector<8x1024xf32>
    %cst_3 = arith.constant 2.550000e+02 : f32
    %8 = vector.broadcast %cst_3 : f32 to vector<8x1024xf32>
    %9 = arith.divf %7, %8 : vector<8x1024xf32>
    %c0_4 = arith.constant 0 : index
    %c0_5 = arith.constant 0 : index
    %10 = vector.load %arg2[%c0_4, %c0_5] : memref<8x1024xf32, #tpu.memory_space<vmem>>, vector<8x1024xf32>
    tpu.vector_store %arg2[%c0_4, %c0_5], %9 {strides = array<i32>} : memref<8x1024xf32, #tpu.memory_space<vmem>>, vector<8x1024xf32>,
    return
  }
  func.func @transform_0(%arg0: i32) -> (i32, i32) {
    %c0_i32 = arith.constant 0 : i32
    %c0_i32_0 = arith.constant 0 : i32
    return %arg0, %c0_i32 : i32, i32
  }
  func.func @transform_1(%arg0: i32) -> (i32, i32) {
    %c0_i32 = arith.constant 0 : i32
    %c0_i32_0 = arith.constant 0 : i32
    return %arg0, %c0_i32 : i32, i32
  }
}

</mosaic_0001>

<llo_original>
// kernel: tpu_custom_call.1
$region0: #{tpu_custom_call.1}
  #allocation0 [shape = 'u32[]', space=smem, size = 0x4, offset = 0x4, fixed_abs, tag = 'smem constant byte address 0x4 - core index']
  #allocation1 [shape = 'u32[144,128]{1,0:T(1,128)}', space=vmem, size = 0x12000, scoped, tag = 'internal scratch']
  %s0 = inlined_call_operand.hbm [shape: f32[49,1024], index: 0, kind: input, shape index: {}]
  %s1 = inlined_call_operand.hbm [shape: f32[49,1024], index: 1, kind: output, shape index: {}]
  %s2 = sld [smem:[#allocation0]]
  $region41: #{tpu_custom_call.1} parent=0
    _
  %s4 = ssub.s32 1, %s2
  %s5 = scalar_select 0, %s4, %s2
  $region1: #{tpu_custom_call.1} parent=0
    #allocation2 [shape = 'u8[65536]{0}', space=vmem, size = 0x10000, scoped, tag = 'input window, operand 0']
    #allocation3 [shape = 's32[2]{0}', space=sflag, size = 0x8, scoped, tag = 'scoped memory for tpu_custom_call.1']
    #allocation4 [shape = 's32[2]{0}', space=sflag, size = 0x8, scoped, tag = 'scoped memory for tpu_custom_call.1']
    #allocation5 [shape = 'u8[65536]{0}', space=vmem, size = 0x10000, scoped, tag = 'output window, operand 0']
    %6 = vsyncpa [#allocation3], 0
    %s7 = scalar_lea.sflag [#allocation3], 1
    %8 = vsyncpa %s7, 0
    %9 = vsyncpa [#allocation4], 0
    %s10 = scalar_lea.sflag [#allocation4], 1
    %11 = vsyncpa %s10, 0
    loop: start=0, step=1, limit=9
    $region2: #{tpu_custom_call.1} parent=1 // loop_pre_header
      _
    $region3: #{tpu_custom_call.1} parent=1 // loop_header
      %s13 = sphi 0, %s17
      %p14 = scmp.ge.s32.totalorder %s13, 9
      %s23 = sphi 0, %s25
      %s26 = sphi 0, %s23
      %s27 = sphi 0, %s26
      %s43 = sphi 0, %s27
      %s49 = sphi 0, %s51
      %s52 = sphi 0, %s49
      %s53 = sphi 0, %s52
      %s69 = sphi 0, %s53
    $region4: #{tpu_custom_call.1} parent=1 // loop_header_branch
      %16 = sbr.rel (%p14) target = $region8
    $region5: #{tpu_custom_call.1} parent=1 // loop_body
      %s18 = ssub.s32 %s13, 1
      %s19 = ssub.s32 %s13, 2
      %s20 = sadd.s32 %s13, 1
      %s21 = ssub.s32 %s13, %s20
      %p22 = scmp.eq.s32.totalorder %s21, 0
      %s24 = sadd.s32 %s23, 1
      %s25 = scalar_select %p22, %s23, %s24
      %p28 = pneg %p22
      %p29 = scmp.eq.s32.totalorder %s13, 6
      %p30 = por %p28, %p29
      %p31 = scmp.ne.s32.totalorder %s23, %s26
      %p32 = scmp.eq.s32.totalorder %s13, 0
      %p33 = por %p31, %p32
      %p34 = scmp.ne.s32.totalorder %s23, %s26
      %p35 = scmp.eq.s32.totalorder %s18, 6
      %p36 = por %p34, %p35
      %p37 = scmp.ne.s32.totalorder %s26, %s27
      %p38 = scmp.eq.s32.totalorder %s18, 0
      %p39 = por %p37, %p38
      %p40 = scmp.ne.s32.totalorder %s26, %s27
      %p41 = scmp.eq.s32.totalorder %s19, 6
      %p42 = por %p40, %p41
      %p44 = scmp.ne.s32.totalorder %s27, %s43
      %p45 = scmp.eq.s32.totalorder %s19, 0
      %p46 = por %p44, %p45
      %s47 = ssub.s32 %s13, %s20
      %p48 = scmp.eq.s32.totalorder %s47, 0
      %s50 = sadd.s32 %s49, 1
      %s51 = scalar_select %p48, %s49, %s50
      %p54 = pneg %p48
      %p55 = scmp.eq.s32.totalorder %s13, 6
      %p56 = por %p54, %p55
      %p57 = scmp.ne.s32.totalorder %s49, %s52
      %p58 = scmp.eq.s32.totalorder %s13, 0
      %p59 = por %p57, %p58
      %p60 = scmp.ne.s32.totalorder %s49, %s52
      %p61 = scmp.eq.s32.totalorder %s18, 6
      %p62 = por %p60, %p61
      %p63 = scmp.ne.s32.totalorder %s52, %s53
      %p64 = scmp.eq.s32.totalorder %s18, 0
      %p65 = por %p63, %p64
      %p66 = scmp.ne.s32.totalorder %s52, %s53
      %p67 = scmp.eq.s32.totalorder %s19, 6
      %p68 = por %p66, %p67
      %p70 = scmp.ne.s32.totalorder %s53, %s69
      %p71 = scmp.eq.s32.totalorder %s19, 0
      %p72 = por %p70, %p71
      %p73 = scmp.le.s32.totalorder 1, %s13
      %p74 = scmp.lt.s32.totalorder %s13, 8
      %p75 = pnand %p73, %p74
      %p76 = pneg %p75
      // Predicated region
      $region9: #{tpu_custom_call.1} parent=5 // pred_check
        _
      $region10: #{tpu_custom_call.1} parent=5 // pred_check_branch
        %78 = sbr.rel (%p75) target = $region12
      $region11: #{tpu_custom_call.1} parent=5 // pred_region
        %s79 = ssub.s32 %s13, 1
      $region12: #{tpu_custom_call.1} parent=5 // pred_fallthru
        _
      %p80 = scmp.lt.s32.totalorder %s13, 7
      // Predicated region
      $region13: #{tpu_custom_call.1} parent=5 // pred_check
        %p81 = pneg %p80
      $region14: #{tpu_custom_call.1} parent=5 // pred_check_branch
        %83 = sbr.rel (%p81) target = $region16
      $region15: #{tpu_custom_call.1} parent=5 // pred_region
        // Predicated region
        $region17: #{tpu_custom_call.1} parent=15 // pred_check
          %p84 = pneg %p33
        $region18: #{tpu_custom_call.1} parent=15 // pred_check_branch
          %86 = sbr.rel (%p84) target = $region20
        $region19: #{tpu_custom_call.1} parent=15 // pred_region
          %s87 = sand.u32 %s23, 1
          %s88 = scalar_lea.sflag [#allocation3], %s87
          %s89 = sand.u32 %s23, 1
          %s90 = smul.addr %s89, 64
          %s91 = scalar_lea.vmem [#allocation2], %s90
          %s93 = ssub.s32 1024, 1024
          %94 = vsyncadd %s88, %s93
          %s95 = smul.addr %s13, 8
          %s96 = smul.addr %s95, 128
          %s97 = scalar_lea.hbm %s0, %s96
          %s99 = sshll.u32 %s91, 4
          %s100 = int_to_ptr.vmem [resolvable:$true] %s99
          %102 = dma.hbm_to_vmem [thread:$0]  %s97, 1024, %s100, %s88
        $region20: #{tpu_custom_call.1} parent=15 // pred_fallthru
          _
      $region16: #{tpu_custom_call.1} parent=5 // pred_fallthru
        _
      %p103 = scmp.le.s32.totalorder 1, %s13
      %p104 = scmp.lt.s32.totalorder %s13, 8
      %p105 = pnand %p103, %p104
      %p106 = pneg %p105
      // Predicated region
      $region21: #{tpu_custom_call.1} parent=5 // pred_check
        _
      $region22: #{tpu_custom_call.1} parent=5 // pred_check_branch
        %108 = sbr.rel (%p105) target = $region24
      $region23: #{tpu_custom_call.1} parent=5 // pred_region
        %s109 = ssub.s32 %s13, 1
        %s110 = sand.u32 %s26, 1
        %s111 = scalar_lea.sflag [#allocation3], %s110
        %s112 = sand.u32 %s26, 1
        %s113 = smul.addr %s112, 64
        %s114 = scalar_lea.vmem [#allocation2], %s113
        // Predicated region
        $region25: #{tpu_custom_call.1} parent=23 // pred_check
          %p115 = pneg %p39
        $region26: #{tpu_custom_call.1} parent=23 // pred_check_branch
          %117 = sbr.rel (%p115) target = $region28
        $region27: #{tpu_custom_call.1} parent=23 // pred_region
          %118 = dma.done %s111, 1024
        $region28: #{tpu_custom_call.1} parent=23 // pred_fallthru
          _
        %s119 = sand.u32 %s26, 1
        %s120 = scalar_lea.sflag [#allocation3], %s119
        %s121 = sand.u32 %s26, 1
        %s122 = smul.addr %s121, 64
        %s123 = scalar_lea.vmem [#allocation2], %s122
        %p124 = pneg %p39
        %p125 = pneg %p36
        %p126 = pneg %p65
        %p127 = pneg %p62
        %s128 = sand.u32 %s52, 1
        %s129 = scalar_lea.sflag [#allocation4], %s128
        %s130 = sand.u32 %s52, 1
        %s131 = smul.addr %s130, 64
        %s132 = scalar_lea.vmem [#allocation5], %s131
        %v133 = vld [vmem:[%s114] sm:$0xff]
        %v134 = vld [vmem:[%s114 + $0x8] sm:$0xff]
        %v135 = vld [vmem:[%s114 + $0x10] sm:$0xff]
        %v136 = vld [vmem:[%s114 + $0x18] sm:$0xff]
        %v137 = vld [vmem:[%s114 + $0x20] sm:$0xff]
        %v138 = vld [vmem:[%s114 + $0x28] sm:$0xff]
        %v139 = vld [vmem:[%s114 + $0x30] sm:$0xff]
        %v140 = vld [vmem:[%s114 + $0x38] sm:$0xff]
        %v141 = vmax.f32 %v133, 0.0
        %v142 = vmax.f32 %v134, 0.0
        %v143 = vmax.f32 %v135, 0.0
        %v144 = vmax.f32 %v136, 0.0
        %v145 = vmax.f32 %v137, 0.0
        %v146 = vmax.f32 %v138, 0.0
        %v147 = vmax.f32 %v139, 0.0
        %v148 = vmax.f32 %v140, 0.0
        %v149 = vmin.f32 %v141, 1.0
        %v150 = vmin.f32 %v142, 1.0
        %v151 = vmin.f32 %v143, 1.0
        %v152 = vmin.f32 %v144, 1.0
        %v153 = vmin.f32 %v145, 1.0
        %v154 = vmin.f32 %v146, 1.0
        %v155 = vmin.f32 %v147, 1.0
        %v156 = vmin.f32 %v148, 1.0
        %v157 = vmul.f32 %v149, 255.0
        %v158 = vmul.f32 %v150, 255.0
        %v159 = vmul.f32 %v151, 255.0
        %v160 = vmul.f32 %v152, 255.0
        %v161 = vmul.f32 %v153, 255.0
        %v162 = vmul.f32 %v154, 255.0
        %v163 = vmul.f32 %v155, 255.0
        %v164 = vmul.f32 %v156, 255.0
        %v165 = vround.ne.pseudo %v157
        %v166 = vround.ne.pseudo %v158
        %v167 = vround.ne.pseudo %v159
        %v168 = vround.ne.pseudo %v160
        %v169 = vround.ne.pseudo %v161
        %v170 = vround.ne.pseudo %v162
        %v171 = vround.ne.pseudo %v163
        %v172 = vround.ne.pseudo %v164
        %v173 = vrcp.pop 255.0
        %v174 = vmul.f32 %v165, %v173
        %v175 = vmul.f32 %v166, %v173
        %v176 = vmul.f32 %v167, %v173
        %v177 = vmul.f32 %v168, %v173
        %v178 = vmul.f32 %v169, %v173
        %v179 = vmul.f32 %v170, %v173
        %v180 = vmul.f32 %v171, %v173
        %v181 = vmul.f32 %v172, %v173
        %182 = vst [vmem:[%s132] sm:$0xff] %v174
        %183 = vst [vmem:[%s132 + $0x8] sm:$0xff] %v175
        %184 = vst [vmem:[%s132 + $0x10] sm:$0xff] %v176
        %185 = vst [vmem:[%s132 + $0x18] sm:$0xff] %v177
        %186 = vst [vmem:[%s132 + $0x20] sm:$0xff] %v178
        %187 = vst [vmem:[%s132 + $0x28] sm:$0xff] %v179
        %188 = vst [vmem:[%s132 + $0x30] sm:$0xff] %v180
        %189 = vst [vmem:[%s132 + $0x38] sm:$0xff] %v181
        %s190 = sand.u32 %s52, 1
        %s191 = scalar_lea.sflag [#allocation4], %s190
        %s192 = sand.u32 %s52, 1
        %s193 = smul.addr %s192, 64
        %s194 = scalar_lea.vmem [#allocation5], %s193
        // Predicated region
        $region29: #{tpu_custom_call.1} parent=23 // pred_check
          %p195 = pneg %p62
        $region30: #{tpu_custom_call.1} parent=23 // pred_check_branch
          %197 = sbr.rel (%p195) target = $region32
        $region31: #{tpu_custom_call.1} parent=23 // pred_region
          %s199 = ssub.s32 1024, 1024
          %200 = vsyncadd %s191, %s199
          %s201 = smul.addr %s18, 8
          %s202 = smul.addr %s201, 128
          %s203 = scalar_lea.hbm %s1, %s202
          %s205 = sshll.u32 %s194, 4
          %s206 = int_to_ptr.vmem [resolvable:$true] %s205
          %208 = dma.vmem_to_hbm [thread:$0]  %s206, 1024, %s203, %s191
        $region32: #{tpu_custom_call.1} parent=23 // pred_fallthru
          _
      $region24: #{tpu_custom_call.1} parent=5 // pred_fallthru
        _
      %p209 = scmp.le.s32.totalorder 2, %s13
      // Predicated region
      $region33: #{tpu_custom_call.1} parent=5 // pred_check
        %p210 = pneg %p209
      $region34: #{tpu_custom_call.1} parent=5 // pred_check_branch
        %212 = sbr.rel (%p210) target = $region36
      $region35: #{tpu_custom_call.1} parent=5 // pred_region
        %s213 = ssub.s32 %s13, 2
        // Predicated region
        $region37: #{tpu_custom_call.1} parent=35 // pred_check
          %p214 = pneg %p68
        $region38: #{tpu_custom_call.1} parent=35 // pred_check_branch
          %216 = sbr.rel (%p214) target = $region40
        $region39: #{tpu_custom_call.1} parent=35 // pred_region
          %s217 = sand.u32 %s53, 1
          %s218 = scalar_lea.sflag [#allocation4], %s217
          %s219 = sand.u32 %s53, 1
          %s220 = smul.addr %s219, 64
          %s221 = scalar_lea.vmem [#allocation5], %s220
          %222 = dma.done %s218, 1024
        $region40: #{tpu_custom_call.1} parent=35 // pred_fallthru
          _
      $region36: #{tpu_custom_call.1} parent=5 // pred_fallthru
        _
    $region6: #{tpu_custom_call.1} parent=1 // loop_footer
      %s17 = sadd.s32 1, %s13
    $region7: #{tpu_custom_call.1} parent=1 // loop_footer_branch
      %12 = sbr.rel target = $region3
    $region8: #{tpu_custom_call.1} parent=1 // loop_exit
      _
    %223 = vsyncpa [#allocation3], 1
    %s224 = scalar_lea.sflag [#allocation3], 1
    %225 = vsyncpa %s224, 1
    %226 = vsyncpa [#allocation4], 1
    %s227 = scalar_lea.sflag [#allocation4], 1
    %228 = vsyncpa %s227, 1

</llo_original>
